<compile_context>
chip_gen: v7x
topology: tpu7x:2x2x1
jax: 0.10.0
libtpu: 0.0.40
codegen_flags: <defaults>
</compile_context>

<pallas_src>
import jax
import jax.numpy as jnp
from jax.experimental import pallas as pl
from jax.experimental.pallas import tpu as pltpu


def _silu(x):
    return x * jax.nn.sigmoid(x)


def _cdiv(a, b):
    return (a + b - 1) // b


def _round_up(a, b):
    return _cdiv(a, b) * b


def _make_adapter_kernel(separate_residual, write_down, write_up):
    """Builds a kernel body for the chosen input/output configuration."""

    def kernel(*refs):
        it = iter(refs)
        x_ref = next(it)
        res_ref = next(it) if separate_residual else x_ref
        wd_ref = next(it)
        bd_ref = next(it)
        wu_ref = next(it)
        bu_ref = next(it)
        out_ref = next(it)
        down_ref = next(it) if write_down else None
        up_ref = next(it) if write_up else None

        # Down projection (MXU), f32 accumulation, + bias.
        h = jnp.dot(x_ref[...], wd_ref[...], preferred_element_type=jnp.float32)
        h = h + bd_ref[...].astype(jnp.float32)

        # SiLU applied twice ON PURPOSE: once inside adapter_down's Sequential and
        # once more by the explicit self.non_linearity(down) call in forward().
        d = _silu(_silu(h))
        if write_down:
            down_ref[...] = d.astype(down_ref.dtype)

        # Up projection (MXU), f32 accumulation, + bias.  scaling == 1.0 removed.
        u = jnp.dot(d.astype(wu_ref.dtype), wu_ref[...],
                    preferred_element_type=jnp.float32)
        u = u + bu_ref[...].astype(jnp.float32)
        if write_up:
            up_ref[...] = u.astype(up_ref.dtype)

        # Residual added after up projection (adapter_residual_before_ln=False,
        # add_layer_norm_after=False, use_gating=False).
        out_ref[...] = (u + res_ref[...].astype(jnp.float32)).astype(out_ref.dtype)

    return kernel


def _vmem_defaults():
    """Per-generation (budget, limit) in bytes; conservative when unknown."""
    cap = None
    try:
        cap = int(pltpu.get_tpu_info().vmem_capacity_bytes)
    except Exception:
        cap = None
    if cap is not None and cap >= 100 * 1024 * 1024:
        # v5e / v6e: 128 MiB physical VMEM per TensorCore.
        return 96 * 1024 * 1024, 112 * 1024 * 1024
    # v7x (64 MiB) or unknown: stay well inside physical VMEM.
    return 40 * 1024 * 1024, 56 * 1024 * 1024


def adapter_forward(x, residual, w_down, b_down, w_up, b_up, *, tm=512,
                    return_down=True, return_up=True, residual_is_x=None,
                    vmem_budget_bytes=None, vmem_limit_bytes=None):
    """Fused adapter forward.

    x, residual : (M, H)       w_down : (H, D)   b_down : (D,)
                                w_up   : (D, H)   b_up   : (H,)
    Returns (output, down, up); `down` / `up` are None when return_down /
    return_up is False.  Output dtype follows x.dtype (pass bf16 everything for
    bf16 HBM I/O; accumulation stays f32 inside the kernel).
    """
    M, H = x.shape
    D = w_down.shape[1]
    out_dtype = x.dtype

    if residual_is_x is None:
        residual_is_x = residual is x
    separate_residual = not residual_is_x

    budget_default, limit_default = _vmem_defaults()
    if vmem_budget_bytes is None:
        vmem_budget_bytes = budget_default
    if vmem_limit_bytes is None:
        vmem_limit_bytes = limit_default

    x_item = jnp.dtype(x.dtype).itemsize
    o_item = jnp.dtype(out_dtype).itemsize
    w_item = jnp.dtype(w_down.dtype).itemsize

    # Row tile: as large as fits the VMEM budget, but capped so the row grid has
    # >= ~8 steps (keeps both TensorCores busy on v7x via the "parallel" axis and
    # keeps the DMA double-buffer pipeline full on every generation).
    tm_eff = _round_up(min(tm, M), 8)
    tm_eff = min(tm_eff, max(8, _round_up(_cdiv(M, 8), 8)))

    def vmem_estimate(t):
        # Double-buffered pipelined tiles (inputs + outputs).
        tiles = 2 * t * H * x_item                       # x
        if separate_residual:
            tiles += 2 * t * H * x_item                  # residual
        tiles += 2 * t * H * o_item                      # output
        if return_down:
            tiles += 2 * t * D * o_item
        if return_up:
            tiles += 2 * t * H * o_item
        # f32 matmul results / intermediates (h/d and u) materialized in VMEM.
        tiles += 2 * (t * D + t * H) * 4
        # Whole-array resident weights + biases (single-buffered, no pipeline).
        weights = (2 * H * D + H + D) * w_item
        return tiles + weights + (2 << 20)               # Mosaic internal slack

    while tm_eff > 8 and vmem_estimate(tm_eff) > vmem_budget_bytes:
        tm_eff = max(8, _round_up(tm_eff // 2, 8))

    grid = (_cdiv(M, tm_eff),)   # ragged last row block handled by Pallas masking

    row_spec_h = pl.BlockSpec((tm_eff, H), lambda i: (i, 0))
    row_spec_d = pl.BlockSpec((tm_eff, D), lambda i: (i, 0))
    vmem_whole = pl.BlockSpec(memory_space=pltpu.MemorySpace.VMEM)

    in_specs = [row_spec_h]
    inputs = [x]
    if separate_residual:
        in_specs.append(row_spec_h)
        inputs.append(residual)
    in_specs += [vmem_whole, vmem_whole, vmem_whole, vmem_whole]
    inputs += [w_down, b_down.reshape(1, D), w_up, b_up.reshape(1, H)]

    out_shapes = [jax.ShapeDtypeStruct((M, H), out_dtype)]
    out_specs = [row_spec_h]
    if return_down:
        out_shapes.append(jax.ShapeDtypeStruct((M, D), out_dtype))
        out_specs.append(row_spec_d)
    if return_up:
        out_shapes.append(jax.ShapeDtypeStruct((M, H), out_dtype))
        out_specs.append(row_spec_h)

    # Advisory cost estimate for XLA's scheduler around the custom call.
    bytes_in = M * H * x_item * (2 if separate_residual else 1)
    bytes_w = (2 * H * D + H + D) * w_item
    bytes_out = M * H * o_item * (1 + (1 if return_up else 0))
    bytes_out += (M * D * o_item) if return_down else 0
    cost = pl.CostEstimate(flops=4 * M * H * D,
                           transcendentals=2 * M * D,
                           bytes_accessed=bytes_in + bytes_w + bytes_out)

    kernel = _make_adapter_kernel(separate_residual, return_down, return_up)

    results = pl.pallas_call(
        kernel,
        out_shape=tuple(out_shapes),
        grid_spec=pltpu.PrefetchScalarGridSpec(
            num_scalar_prefetch=0,
            grid=grid,
            in_specs=in_specs,
            out_specs=out_specs,
        ),
        compiler_params=pltpu.CompilerParams(
            dimension_semantics=("parallel",),
            vmem_limit_bytes=vmem_limit_bytes,
        ),
        cost_estimate=cost,
    )(*inputs)

    if not isinstance(results, (tuple, list)):
        results = (results,)
    results = list(results)
    output = results.pop(0)
    down = results.pop(0) if return_down else None
    up = results.pop(0) if return_up else None
    return output, down, up


def _reference(x, residual, w_down, b_down, w_up, b_up):
    """Pure-JAX reference mirroring the kernel's mixed-precision behaviour."""
    xf = x.astype(jnp.float32)
    h = xf @ w_down.astype(jnp.float32) + b_down.astype(jnp.float32)
    d = _silu(_silu(h))
    u = d.astype(w_up.dtype).astype(jnp.float32) @ w_up.astype(jnp.float32)
    u = u + b_up.astype(jnp.float32)
    o = u + residual.astype(jnp.float32)
    return o, d, u


if __name__ == "__main__":
    # Adapter(adapter_name="a", input_size=32, down_sample=None) -> down_sample = 16
    B, S, H = 2, 8, 32
    D = H // 2

    key = jax.random.PRNGKey(0)
    k_x, k_r, k_wd, k_wu = jax.random.split(key, 4)

    x = jax.random.normal(k_x, (B, S, H), dtype=jnp.float32)
    residual = jax.random.normal(k_r, (B, S, H), dtype=jnp.float32)

    # init_bert_weights: Linear weights ~ N(0, 0.02), biases = 0.
    # PyTorch Linear stores weight as (out, in); pre-transposed here to (in, out).
    w_down = 0.02 * jax.random.normal(k_wd, (H, D), dtype=jnp.float32)
    b_down = jnp.zeros((D,), dtype=jnp.float32)
    w_up = 0.02 * jax.random.normal(k_wu, (D, H), dtype=jnp.float32)
    b_up = jnp.zeros((H,), dtype=jnp.float32)

    x2 = x.reshape(B * S, H)
    r2 = residual.reshape(B * S, H)

    # 1) f32, separate residual, all three outputs (full module semantics).
    out2, down2, up2 = adapter_forward(x2, r2, w_down, b_down, w_up, b_up)
    jax.block_until_ready((out2, down2, up2))
    o_ref, d_ref, u_ref = _reference(x2, r2, w_down, b_down, w_up, b_up)
    assert jnp.allclose(out2, o_ref, atol=1e-5, rtol=1e-5)
    assert jnp.allclose(down2, d_ref, atol=1e-5, rtol=1e-5)
    assert jnp.allclose(up2, u_ref, atol=1e-5, rtol=1e-5)

    output = out2.reshape(B, S, H)
    down = down2.reshape(B, S, D)
    up = up2.reshape(B, S, H)
    jax.block_until_ready((output, down, up))

    # 2) output-only path (skips the `down` / `up` HBM writes).
    o_only, d_none, u_none = adapter_forward(x2, r2, w_down, b_down, w_up, b_up,
                                             return_down=False, return_up=False)
    jax.block_until_ready(o_only)
    assert d_none is None and u_none is None
    assert jnp.allclose(o_only, o_ref, atol=1e-5, rtol=1e-5)

    # 3) bf16 HBM I/O, residual aliases x (deduped read), M not a multiple of the
    #    row tile (ragged last block), D < 128 (native-width masked store).
    M2, H2, D2 = 200, 256, 64
    k1, k3, k4 = jax.random.split(jax.random.PRNGKey(1), 3)
    xb = jax.random.normal(k1, (M2, H2), dtype=jnp.float32).astype(jnp.bfloat16)
    wdb = (0.02 * jax.random.normal(k3, (H2, D2), jnp.float32)).astype(jnp.bfloat16)
    bdb = jnp.zeros((D2,), dtype=jnp.bfloat16)
    wub = (0.02 * jax.random.normal(k4, (D2, H2), jnp.float32)).astype(jnp.bfloat16)
    bub = jnp.zeros((H2,), dtype=jnp.bfloat16)

    ob, db, ub = adapter_forward(xb, xb, wdb, bdb, wub, bub, tm=64)
    jax.block_until_ready((ob, db, ub))
    o_r, d_r, u_r = _reference(xb, xb, wdb, bdb, wub, bub)
    assert jnp.allclose(ob.astype(jnp.float32), o_r, atol=2e-2, rtol=2e-2)
    assert jnp.allclose(db.astype(jnp.float32), d_r, atol=2e-2, rtol=2e-2)
    assert jnp.allclose(ub.astype(jnp.float32), u_r, atol=2e-2, rtol=2e-2)

    print("KERNEL_OK")
</pallas_src>

<mosaic_0001>
module attributes {stable_mosaic.version = 11 : i64} {
  func.func @kernel(%arg0: i32, %arg1: memref<8x32xf32, #tpu.memory_space<vmem>>, %arg2: memref<8x32xf32, #tpu.memory_space<vmem>>, %arg3: memref<32x16xf32, #tpu.memory_space<vmem>>, %arg4: memref<1x16xf32, #tpu.memory_space<vmem>>, %arg5: memref<16x32xf32, #tpu.memory_space<vmem>>, %arg6: memref<1x32xf32, #tpu.memory_space<vmem>>, %arg7: memref<8x32xf32, #tpu.memory_space<vmem>>, %arg8: memref<8x16xf32, #tpu.memory_space<vmem>>, %arg9: memref<8x32xf32, #tpu.memory_space<vmem>>) attributes {dimension_semantics = [#tpu.dimension_semantics<parallel>], iteration_bounds = array<i64: 2>, scalar_prefetch = 0 : i64, scratch_operands = 0 : i64, tpu.core_type = #tpu.core_type<tc>, window_params = [{transform_indices = @transform_0, window_bounds = array<i64: 8, 32>}, {transform_indices = @transform_1, window_bounds = array<i64: 8, 32>}, {pipeline_mode = #tpu.pipeline_mode<synchronous>, transform_indices = @transform_2, window_bounds = array<i64: 32, 16>}, {pipeline_mode = #tpu.pipeline_mode<synchronous>, transform_indices = @transform_3, window_bounds = array<i64: 1, 16>}, {pipeline_mode = #tpu.pipeline_mode<synchronous>, transform_indices = @transform_4, window_bounds = array<i64: 16, 32>}, {pipeline_mode = #tpu.pipeline_mode<synchronous>, transform_indices = @transform_5, window_bounds = array<i64: 1, 32>}, {transform_indices = @transform_6, window_bounds = array<i64: 8, 32>}, {transform_indices = @transform_7, window_bounds = array<i64: 8, 16>}, {transform_indices = @transform_8, window_bounds = array<i64: 8, 32>}]} {
    %c0 = arith.constant 0 : index
    %c0_0 = arith.constant 0 : index
    %0 = vector.load %arg1[%c0, %c0_0] : memref<8x32xf32, #tpu.memory_space<vmem>>, vector<8x32xf32>
    %c0_1 = arith.constant 0 : index
    %c0_2 = arith.constant 0 : index
    %1 = vector.load %arg3[%c0_1, %c0_2] : memref<32x16xf32, #tpu.memory_space<vmem>>, vector<32x16xf32>
    %cst = arith.constant dense<0.000000e+00> : vector<8x16xf32>
    %2 = tpu.matmul %0, %1, %cst {dimension_numbers = #tpu.dot_dimension_numbers<[1], [0], [0], [1], [0, 0, 1, 1], [], []>} : vector<8x32xf32>, vector<32x16xf32>, vector<8x16xf32> -> vector<8x16xf32>
    %c0_3 = arith.constant 0 : index
    %c0_4 = arith.constant 0 : index
    %3 = vector.load %arg4[%c0_3, %c0_4] : memref<1x16xf32, #tpu.memory_space<vmem>>, vector<1x16xf32>
    %4 = vector.broadcast %3 : vector<1x16xf32> to vector<8x16xf32>
    %5 = arith.addf %2, %4 : vector<8x16xf32>
    %6 = arith.negf %5 : vector<8x16xf32>
    %7 = math.exp %6 : vector<8x16xf32>
    %cst_5 = arith.constant 1.000000e+00 : f32
    %8 = vector.broadcast %cst_5 : f32 to vector<8x16xf32>
    %9 = arith.addf %8, %7 : vector<8x16xf32>
    %10 = arith.divf %8, %9 : vector<8x16xf32>
    %11 = arith.mulf %5, %10 : vector<8x16xf32>
    %12 = arith.negf %11 : vector<8x16xf32>
    %13 = math.exp %12 : vector<8x16xf32>
    %cst_6 = arith.constant 1.000000e+00 : f32
    %14 = vector.broadcast %cst_6 : f32 to vector<8x16xf32>
    %15 = arith.addf %14, %13 : vector<8x16xf32>
    %16 = arith.divf %14, %15 : vector<8x16xf32>
    %17 = arith.mulf %11, %16 : vector<8x16xf32>
    %c0_7 = arith.constant 0 : index
    %c0_8 = arith.constant 0 : index
    %18 = vector.load %arg8[%c0_7, %c0_8] : memref<8x16xf32, #tpu.memory_space<vmem>>, vector<8x16xf32>
    tpu.vector_store %arg8[%c0_7, %c0_8], %17 {strides = array<i32>} : memref<8x16xf32, #tpu.memory_space<vmem>>, vector<8x16xf32>,
    %c0_9 = arith.constant 0 : index
    %c0_10 = arith.constant 0 : index
    %19 = vector.load %arg5[%c0_9, %c0_10] : memref<16x32xf32, #tpu.memory_space<vmem>>, vector<16x32xf32>
    %cst_11 = arith.constant dense<0.000000e+00> : vector<8x32xf32>
    %20 = tpu.matmul %17, %19, %cst_11 {dimension_numbers = #tpu.dot_dimension_numbers<[1], [0], [0], [1], [0, 0, 1, 1], [], []>} : vector<8x16xf32>, vector<16x32xf32>, vector<8x32xf32> -> vector<8x32xf32>
    %c0_12 = arith.constant 0 : index
    %c0_13 = arith.constant 0 : index
    %21 = vector.load %arg6[%c0_12, %c0_13] : memref<1x32xf32, #tpu.memory_space<vmem>>, vector<1x32xf32>
    %22 = vector.broadcast %21 : vector<1x32xf32> to vector<8x32xf32>
    %23 = arith.addf %20, %22 : vector<8x32xf32>
    %c0_14 = arith.constant 0 : index
    %c0_15 = arith.constant 0 : index
    %24 = vector.load %arg9[%c0_14, %c0_15] : memref<8x32xf32, #tpu.memory_space<vmem>>, vector<8x32xf32>
    tpu.vector_store %arg9[%c0_14, %c0_15], %23 {strides = array<i32>} : memref<8x32xf32, #tpu.memory_space<vmem>>, vector<8x32xf32>,
    %c0_16 = arith.constant 0 : index
    %c0_17 = arith.constant 0 : index
    %25 = vector.load %arg2[%c0_16, %c0_17] : memref<8x32xf32, #tpu.memory_space<vmem>>, vector<8x32xf32>
    %26 = arith.addf %23, %25 : vector<8x32xf32>
    %c0_18 = arith.constant 0 : index
    %c0_19 = arith.constant 0 : index
    %27 = vector.load %arg7[%c0_18, %c0_19] : memref<8x32xf32, #tpu.memory_space<vmem>>, vector<8x32xf32>
    tpu.vector_store %arg7[%c0_18, %c0_19], %26 {strides = array<i32>} : memref<8x32xf32, #tpu.memory_space<vmem>>, vector<8x32xf32>,
    return
  }
  func.func @transform_0(%arg0: i32) -> (i32, i32) {
    %c0_i32 = arith.constant 0 : i32
    %c0_i32_0 = arith.constant 0 : i32
    return %arg0, %c0_i32 : i32, i32
  }
  func.func @transform_1(%arg0: i32) -> (i32, i32) {
    %c0_i32 = arith.constant 0 : i32
    %c0_i32_0 = arith.constant 0 : i32
    return %arg0, %c0_i32 : i32, i32
  }
  func.func @transform_2(%arg0: i32) -> (i32, i32) {
    %c0_i32 = arith.constant 0 : i32
    %c0_i32_0 = arith.constant 0 : i32
    %c0_i32_1 = arith.constant 0 : i32
    return %c0_i32, %c0_i32_0 : i32, i32
  }
  func.func @transform_3(%arg0: i32) -> (i32, i32) {
    %c0_i32 = arith.constant 0 : i32
    %c0_i32_0 = arith.constant 0 : i32
    %c0_i32_1 = arith.constant 0 : i32
    return %c0_i32, %c0_i32_0 : i32, i32
  }
  func.func @transform_4(%arg0: i32) -> (i32, i32) {
    %c0_i32 = arith.constant 0 : i32
    %c0_i32_0 = arith.constant 0 : i32
    %c0_i32_1 = arith.constant 0 : i32
    return %c0_i32, %c0_i32_0 : i32, i32
  }
  func.func @transform_5(%arg0: i32) -> (i32, i32) {
    %c0_i32 = arith.constant 0 : i32
    %c0_i32_0 = arith.constant 0 : i32
    %c0_i32_1 = arith.constant 0 : i32
    return %c0_i32, %c0_i32_0 : i32, i32
  }
  func.func @transform_6(%arg0: i32) -> (i32, i32) {
    %c0_i32 = arith.constant 0 : i32
    %c0_i32_0 = arith.constant 0 : i32
    return %arg0, %c0_i32 : i32, i32
  }
  func.func @transform_7(%arg0: i32) -> (i32, i32) {
    %c0_i32 = arith.constant 0 : i32
    %c0_i32_0 = arith.constant 0 : i32
    return %arg0, %c0_i32 : i32, i32
  }
  func.func @transform_8(%arg0: i32) -> (i32, i32) {
    %c0_i32 = arith.constant 0 : i32
    %c0_i32_0 = arith.constant 0 : i32
    return %arg0, %c0_i32 : i32, i32
  }
}

</mosaic_0001>

<llo_original>
// kernel: tpu_custom_call.1
$region0: #{tpu_custom_call.1}
  #allocation0 [shape = 'u32[]', space=smem, size = 0x4, offset = 0x4, fixed_abs, tag = 'smem constant byte address 0x4 - core index']
  #allocation1 [shape = 'u32[144,128]{1,0:T(1,128)}', space=vmem, size = 0x12000, scoped, tag = 'internal scratch']
  %s0 = inlined_call_operand.vmem [shape: f32[16,32], index: 0, kind: input, shape index: {}]
  %s1 = inlined_call_operand.vmem [shape: f32[16,32], index: 1, kind: input, shape index: {}]
  %s2 = inlined_call_operand.vmem [shape: f32[32,16], index: 2, kind: input, shape index: {}]
  %s3 = inlined_call_operand.vmem [shape: f32[1,16], index: 3, kind: input, shape index: {}]
  %s4 = inlined_call_operand.vmem [shape: f32[16,32], index: 4, kind: input, shape index: {}]
  %s5 = inlined_call_operand.vmem [shape: f32[1,32], index: 5, kind: input, shape index: {}]
  %s6 = inlined_call_operand.hbm [shape: f32[16,32], index: 6, kind: output, shape index: {0}]
  %s7 = inlined_call_operand.hbm [shape: f32[16,16], index: 7, kind: output, shape index: {1}]
  %s8 = inlined_call_operand.hbm [shape: f32[16,32], index: 8, kind: output, shape index: {2}]
  %9 = xla_tuple %s6, %s7, %s8
  %s10 = sld [smem:[#allocation0]]
  $region73: #{tpu_custom_call.1} parent=0
    _
  %s12 = ssub.s32 1, %s10
  %s13 = scalar_select 0, %s12, %s10
  $region1: #{tpu_custom_call.1} parent=0
    #allocation2 [shape = 'u8[8192]{0}', space=vmem, size = 0x2000, scoped, tag = 'output window, operand 0']
    #allocation3 [shape = 's32[2]{0}', space=sflag, size = 0x8, scoped, tag = 'scoped memory for tpu_custom_call.1']
    #allocation4 [shape = 'u8[8192]{0}', space=vmem, size = 0x2000, scoped, tag = 'output window, operand 1']
    #allocation5 [shape = 's32[2]{0}', space=sflag, size = 0x8, scoped, tag = 'scoped memory for tpu_custom_call.1']
    #allocation6 [shape = 'u8[8192]{0}', space=vmem, size = 0x2000, scoped, tag = 'output window, operand 2']
    %14 = vsyncpa [#allocation3], 0
    %s15 = scalar_lea.sflag [#allocation3], 1
    %16 = vsyncpa %s15, 0
    %17 = vsyncpa [#allocation5], 0
    %s18 = scalar_lea.sflag [#allocation5], 1
    %19 = vsyncpa %s18, 0
    loop: start=0, step=1, limit=4
    $region2: #{tpu_custom_call.1} parent=1 // loop_pre_header
      _
    $region3: #{tpu_custom_call.1} parent=1 // loop_header
      %s21 = sphi 0, %s25
      %p22 = scmp.ge.s32.totalorder %s21, 4
      %s31 = sphi 0, %s33
      %s34 = sphi 0, %s31
      %s35 = sphi 0, %s34
      %s51 = sphi 0, %s35
      %s57 = sphi 0, %s59
      %s60 = sphi 0, %s57
      %s61 = sphi 0, %s60
      %s77 = sphi 0, %s61
      %s81 = sphi 0, %s81
      %s83 = sphi 0, %s81
      %s84 = sphi 0, %s83
      %s98 = sphi 0, %s84
      %s102 = sphi 0, %s102
      %s104 = sphi 0, %s102
      %s105 = sphi 0, %s104
      %s119 = sphi 0, %s105
      %s123 = sphi 0, %s123
      %s125 = sphi 0, %s123
      %s126 = sphi 0, %s125
      %s140 = sphi 0, %s126
      %s144 = sphi 0, %s144
      %s146 = sphi 0, %s144
      %s147 = sphi 0, %s146
      %s161 = sphi 0, %s147
      %s167 = sphi 0, %s169
      %s170 = sphi 0, %s167
      %s171 = sphi 0, %s170
      %s187 = sphi 0, %s171
      %s193 = sphi 0, %s195
      %s196 = sphi 0, %s193
      %s197 = sphi 0, %s196
      %s213 = sphi 0, %s197
      %s219 = sphi 0, %s221
      %s222 = sphi 0, %s219
      %s223 = sphi 0, %s222
      %s239 = sphi 0, %s223
    $region4: #{tpu_custom_call.1} parent=1 // loop_header_branch
      %24 = sbr.rel (%p22) target = $region8
    $region5: #{tpu_custom_call.1} parent=1 // loop_body
      %s26 = ssub.s32 %s21, 1
      %s27 = ssub.s32 %s21, 2
      %s28 = sadd.s32 %s21, 1
      %s29 = ssub.s32 %s21, %s28
      %p30 = scmp.eq.s32.totalorder %s29, 0
      %s32 = sadd.s32 %s31, 1
      %s33 = scalar_select %p30, %s31, %s32
      %p36 = pneg %p30
      %p37 = scmp.eq.s32.totalorder %s21, 1
      %p38 = por %p36, %p37
      %p39 = scmp.ne.s32.totalorder %s31, %s34
      %p40 = scmp.eq.s32.totalorder %s21, 0
      %p41 = por %p39, %p40
      %p42 = scmp.ne.s32.totalorder %s31, %s34
      %p43 = scmp.eq.s32.totalorder %s26, 1
      %p44 = por %p42, %p43
      %p45 = scmp.ne.s32.totalorder %s34, %s35
      %p46 = scmp.eq.s32.totalorder %s26, 0
      %p47 = por %p45, %p46
      %p48 = scmp.ne.s32.totalorder %s34, %s35
      %p49 = scmp.eq.s32.totalorder %s27, 1
      %p50 = por %p48, %p49
      %p52 = scmp.ne.s32.totalorder %s35, %s51
      %p53 = scmp.eq.s32.totalorder %s27, 0
      %p54 = por %p52, %p53
      %s55 = ssub.s32 %s21, %s28
      %p56 = scmp.eq.s32.totalorder %s55, 0
      %s58 = sadd.s32 %s57, 1
      %s59 = scalar_select %p56, %s57, %s58
      %p62 = pneg %p56
      %p63 = scmp.eq.s32.totalorder %s21, 1
      %p64 = por %p62, %p63
      %p65 = scmp.ne.s32.totalorder %s57, %s60
      %p66 = scmp.eq.s32.totalorder %s21, 0
      %p67 = por %p65, %p66
      %p68 = scmp.ne.s32.totalorder %s57, %s60
      %p69 = scmp.eq.s32.totalorder %s26, 1
      %p70 = por %p68, %p69
      %p71 = scmp.ne.s32.totalorder %s60, %s61
      %p72 = scmp.eq.s32.totalorder %s26, 0
      %p73 = por %p71, %p72
      %p74 = scmp.ne.s32.totalorder %s60, %s61
      %p75 = scmp.eq.s32.totalorder %s27, 1
      %p76 = por %p74, %p75
      %p78 = scmp.ne.s32.totalorder %s61, %s77
      %p79 = scmp.eq.s32.totalorder %s27, 0
      %p80 = por %p78, %p79
      %s82 = sadd.s32 %s81, 1
      %p85 = scmp.eq.s32.totalorder %s21, 1
      %p86 = scmp.ne.s32.totalorder %s81, %s83
      %p87 = scmp.eq.s32.totalorder %s21, 0
      %p88 = por %p86, %p87
      %p89 = scmp.ne.s32.totalorder %s81, %s83
      %p90 = scmp.eq.s32.totalorder %s26, 1
      %p91 = por %p89, %p90
      %p92 = scmp.ne.s32.totalorder %s83, %s84
      %p93 = scmp.eq.s32.totalorder %s26, 0
      %p94 = por %p92, %p93
      %p95 = scmp.ne.s32.totalorder %s83, %s84
      %p96 = scmp.eq.s32.totalorder %s27, 1
      %p97 = por %p95, %p96
      %p99 = scmp.ne.s32.totalorder %s84, %s98
      %p100 = scmp.eq.s32.totalorder %s27, 0
      %p101 = por %p99, %p100
      %s103 = sadd.s32 %s102, 1
      %p106 = scmp.eq.s32.totalorder %s21, 1
      %p107 = scmp.ne.s32.totalorder %s102, %s104
      %p108 = scmp.eq.s32.totalorder %s21, 0
      %p109 = por %p107, %p108
      %p110 = scmp.ne.s32.totalorder %s102, %s104
      %p111 = scmp.eq.s32.totalorder %s26, 1
      %p112 = por %p110, %p111
      %p113 = scmp.ne.s32.totalorder %s104, %s105
      %p114 = scmp.eq.s32.totalorder %s26, 0
      %p115 = por %p113, %p114
      %p116 = scmp.ne.s32.totalorder %s104, %s105
      %p117 = scmp.eq.s32.totalorder %s27, 1
      %p118 = por %p116, %p117
      %p120 = scmp.ne.s32.totalorder %s105, %s119
      %p121 = scmp.eq.s32.totalorder %s27, 0
      %p122 = por %p120, %p121
      %s124 = sadd.s32 %s123, 1
      %p127 = scmp.eq.s32.totalorder %s21, 1
      %p128 = scmp.ne.s32.totalorder %s123, %s125
      %p129 = scmp.eq.s32.totalorder %s21, 0
      %p130 = por %p128, %p129
      %p131 = scmp.ne.s32.totalorder %s123, %s125
      %p132 = scmp.eq.s32.totalorder %s26, 1
      %p133 = por %p131, %p132
      %p134 = scmp.ne.s32.totalorder %s125, %s126
      %p135 = scmp.eq.s32.totalorder %s26, 0
      %p136 = por %p134, %p135
      %p137 = scmp.ne.s32.totalorder %s125, %s126
      %p138 = scmp.eq.s32.totalorder %s27, 1
      %p139 = por %p137, %p138
      %p141 = scmp.ne.s32.totalorder %s126, %s140
      %p142 = scmp.eq.s32.totalorder %s27, 0
      %p143 = por %p141, %p142
      %s145 = sadd.s32 %s144, 1
      %p148 = scmp.eq.s32.totalorder %s21, 1
      %p149 = scmp.ne.s32.totalorder %s144, %s146
      %p150 = scmp.eq.s32.totalorder %s21, 0
      %p151 = por %p149, %p150
      %p152 = scmp.ne.s32.totalorder %s144, %s146
      %p153 = scmp.eq.s32.totalorder %s26, 1
      %p154 = por %p152, %p153
      %p155 = scmp.ne.s32.totalorder %s146, %s147
      %p156 = scmp.eq.s32.totalorder %s26, 0
      %p157 = por %p155, %p156
      %p158 = scmp.ne.s32.totalorder %s146, %s147
      %p159 = scmp.eq.s32.totalorder %s27, 1
      %p160 = por %p158, %p159
      %p162 = scmp.ne.s32.totalorder %s147, %s161
      %p163 = scmp.eq.s32.totalorder %s27, 0
      %p164 = por %p162, %p163
      %s165 = ssub.s32 %s21, %s28
      %p166 = scmp.eq.s32.totalorder %s165, 0
      %s168 = sadd.s32 %s167, 1
      %s169 = scalar_select %p166, %s167, %s168
      %p172 = pneg %p166
      %p173 = scmp.eq.s32.totalorder %s21, 1
      %p174 = por %p172, %p173
      %p175 = scmp.ne.s32.totalorder %s167, %s170
      %p176 = scmp.eq.s32.totalorder %s21, 0
      %p177 = por %p175, %p176
      %p178 = scmp.ne.s32.totalorder %s167, %s170
      %p179 = scmp.eq.s32.totalorder %s26, 1
      %p180 = por %p178, %p179
      %p181 = scmp.ne.s32.totalorder %s170, %s171
      %p182 = scmp.eq.s32.totalorder %s26, 0
      %p183 = por %p181, %p182
      %p184 = scmp.ne.s32.totalorder %s170, %s171
      %p185 = scmp.eq.s32.totalorder %s27, 1
      %p186 = por %p184, %p185
      %p188 = scmp.ne.s32.totalorder %s171, %s187
      %p189 = scmp.eq.s32.totalorder %s27, 0
      %p190 = por %p188, %p189
      %s191 = ssub.s32 %s21, %s28
      %p192 = scmp.eq.s32.totalorder %s191, 0
      %s194 = sadd.s32 %s193, 1
      %s195 = scalar_select %p192, %s193, %s194
      %p198 = pneg %p192
      %p199 = scmp.eq.s32.totalorder %s21, 1
      %p200 = por %p198, %p199
      %p201 = scmp.ne.s32.totalorder %s193, %s196
      %p202 = scmp.eq.s32.totalorder %s21, 0
      %p203 = por %p201, %p202
      %p204 = scmp.ne.s32.totalorder %s193, %s196
      %p205 = scmp.eq.s32.totalorder %s26, 1
      %p206 = por %p204, %p205
      %p207 = scmp.ne.s32.totalorder %s196, %s197
      %p208 = scmp.eq.s32.totalorder %s26, 0
      %p209 = por %p207, %p208
      %p210 = scmp.ne.s32.totalorder %s196, %s197
      %p211 = scmp.eq.s32.totalorder %s27, 1
      %p212 = por %p210, %p211
      %p214 = scmp.ne.s32.totalorder %s197, %s213
      %p215 = scmp.eq.s32.totalorder %s27, 0
      %p216 = por %p214, %p215
      %s217 = ssub.s32 %s21, %s28
      %p218 = scmp.eq.s32.totalorder %s217, 0
      %s220 = sadd.s32 %s219, 1
      %s221 = scalar_select %p218, %s219, %s220
      %p224 = pneg %p218
      %p225 = scmp.eq.s32.totalorder %s21, 1
      %p226 = por %p224, %p225
      %p227 = scmp.ne.s32.totalorder %s219, %s222
      %p228 = scmp.eq.s32.totalorder %s21, 0
      %p229 = por %p227, %p228
      %p230 = scmp.ne.s32.totalorder %s219, %s222
      %p231 = scmp.eq.s32.totalorder %s26, 1
      %p232 = por %p230, %p231
      %p233 = scmp.ne.s32.totalorder %s222, %s223
      %p234 = scmp.eq.s32.totalorder %s26, 0
      %p235 = por %p233, %p234
      %p236 = scmp.ne.s32.totalorder %s222, %s223
      %p237 = scmp.eq.s32.totalorder %s27, 1
      %p238 = por %p236, %p237
      %p240 = scmp.ne.s32.totalorder %s223, %s239
      %p241 = scmp.eq.s32.totalorder %s27, 0
      %p242 = por %p240, %p241
      %p243 = scmp.le.s32.totalorder 1, %s21
      %p244 = scmp.lt.s32.totalorder %s21, 3
      %p245 = pnand %p243, %p244
      %p246 = pneg %p245
      // Predicated region
      $region9: #{tpu_custom_call.1} parent=5 // pred_check
        _
      $region10: #{tpu_custom_call.1} parent=5 // pred_check_branch
        %248 = sbr.rel (%p245) target = $region12
      $region11: #{tpu_custom_call.1} parent=5 // pred_region
        %s249 = ssub.s32 %s21, 1
        // Predicated region
        $region13: #{tpu_custom_call.1} parent=11 // pred_check
          %p250 = pneg %p94
        $region14: #{tpu_custom_call.1} parent=11 // pred_check_branch
          %252 = sbr.rel (%p250) target = $region16
        $region15: #{tpu_custom_call.1} parent=11 // pred_region
          _
        $region16: #{tpu_custom_call.1} parent=11 // pred_fallthru
          _
        // Predicated region
        $region17: #{tpu_custom_call.1} parent=11 // pred_check
          %p253 = pneg %p115
        $region18: #{tpu_custom_call.1} parent=11 // pred_check_branch
          %255 = sbr.rel (%p253) target = $region20
        $region19: #{tpu_custom_call.1} parent=11 // pred_region
          _
        $region20: #{tpu_custom_call.1} parent=11 // pred_fallthru
          _
        // Predicated region
        $region21: #{tpu_custom_call.1} parent=11 // pred_check
          %p256 = pneg %p136
        $region22: #{tpu_custom_call.1} parent=11 // pred_check_branch
          %258 = sbr.rel (%p256) target = $region24
        $region23: #{tpu_custom_call.1} parent=11 // pred_region
          _
        $region24: #{tpu_custom_call.1} parent=11 // pred_fallthru
          _
        // Predicated region
        $region25: #{tpu_custom_call.1} parent=11 // pred_check
          %p259 = pneg %p157
        $region26: #{tpu_custom_call.1} parent=11 // pred_check_branch
          %261 = sbr.rel (%p259) target = $region28
        $region27: #{tpu_custom_call.1} parent=11 // pred_region
          _
        $region28: #{tpu_custom_call.1} parent=11 // pred_fallthru
          _
      $region12: #{tpu_custom_call.1} parent=5 // pred_fallthru
        _
      %p262 = scmp.lt.s32.totalorder %s21, 2
      // Predicated region
      $region29: #{tpu_custom_call.1} parent=5 // pred_check
        %p263 = pneg %p262
      $region30: #{tpu_custom_call.1} parent=5 // pred_check_branch
        %265 = sbr.rel (%p263) target = $region32
      $region31: #{tpu_custom_call.1} parent=5 // pred_region
        // Predicated region
        $region33: #{tpu_custom_call.1} parent=31 // pred_check
          %p266 = pneg %p41
        $region34: #{tpu_custom_call.1} parent=31 // pred_check_branch
          %268 = sbr.rel (%p266) target = $region36
        $region35: #{tpu_custom_call.1} parent=31 // pred_region
          %p269 = scmp.lt.s32.totalorder %s21, 1
          %s270 = scalar_select %p269, %s21, 1
          %s271 = smul.addr %s270, 8
          %s272 = scalar_lea.vmem %s0, %s271
        $region36: #{tpu_custom_call.1} parent=31 // pred_fallthru
          _
        // Predicated region
        $region37: #{tpu_custom_call.1} parent=31 // pred_check
          %p273 = pneg %p67
        $region38: #{tpu_custom_call.1} parent=31 // pred_check_branch
          %275 = sbr.rel (%p273) target = $region40
        $region39: #{tpu_custom_call.1} parent=31 // pred_region
          %p276 = scmp.lt.s32.totalorder %s21, 1
          %s277 = scalar_select %p276, %s21, 1
          %s278 = smul.addr %s277, 8
          %s279 = scalar_lea.vmem %s1, %s278
        $region40: #{tpu_custom_call.1} parent=31 // pred_fallthru
          _
      $region32: #{tpu_custom_call.1} parent=5 // pred_fallthru
        _
      %p280 = scmp.le.s32.totalorder 1, %s21
      %p281 = scmp.lt.s32.totalorder %s21, 3
      %p282 = pnand %p280, %p281
      %p283 = pneg %p282
      // Predicated region
      $region41: #{tpu_custom_call.1} parent=5 // pred_check
        _
      $region42: #{tpu_custom_call.1} parent=5 // pred_check_branch
        %285 = sbr.rel (%p282) target = $region44
      $region43: #{tpu_custom_call.1} parent=5 // pred_region
        %s286 = ssub.s32 %s21, 1
        %p287 = scmp.lt.s32.totalorder %s26, 1
        %s288 = scalar_select %p287, %s26, 1
        %s289 = smul.addr %s288, 8
        %s290 = scalar_lea.vmem %s0, %s289
        %p291 = pneg %p47
        %p292 = pneg %p44
        %p293 = scmp.lt.s32.totalorder %s26, 1
        %s294 = scalar_select %p293, %s26, 1
        %s295 = smul.addr %s294, 8
        %s296 = scalar_lea.vmem %s1, %s295
        %p297 = pneg %p73
        %p298 = pneg %p70
        %p299 = pneg %p94
        %p300 = pneg %p91
        %p301 = pneg %p115
        %p302 = pneg %p112
        %p303 = pneg %p136
        %p304 = pneg %p133
        %p305 = pneg %p157
        %p306 = pneg %p154
        %p307 = pneg %p183
        %p308 = pneg %p180
        %s309 = sand.u32 %s170, 1
        %s310 = scalar_lea.sflag [#allocation3], %s309
        %s311 = sand.u32 %s170, 1
        %s312 = smul.addr %s311, 8
        %s313 = scalar_lea.vmem [#allocation2], %s312
        %p314 = pneg %p209
        %p315 = pneg %p206
        %s316 = sand.u32 %s26, 1
        %s317 = scalar_lea.sflag [#allocation5], %s316
        %s318 = sand.u32 %s196, 1
        %s319 = smul.addr %s318, 8
        %s320 = scalar_lea.vmem [#allocation4], %s319
        %p321 = pneg %p235
        %p322 = pneg %p232
        %s323 = sand.u32 %s26, 1
        %s324 = scalar_lea.sflag [#allocation5], %s323
        %s325 = sand.u32 %s222, 1
        %s326 = smul.addr %s325, 8
        %s327 = scalar_lea.vmem [#allocation6], %s326
        %p328 = scmp.lt.s32.totalorder %s26, 1
        %s329 = scalar_select %p328, %s26, 1
        %s330 = smul.addr %s329, 8
        %s331 = scalar_lea.vmem %s0, %s330
        %p332 = scmp.lt.s32.totalorder %s26, 1
        %s333 = scalar_select %p332, %s26, 1
        %s334 = smul.addr %s333, 8
        %s335 = scalar_lea.vmem %s1, %s334
        %v336 = vld [vmem:[%s331] sm:$0xff]
        %v337 = vld [vmem:[%s2] sm:$0xff]
        %v338 = vld [vmem:[%s2 + $0x8] sm:$0xff]
        %v339 = vld [vmem:[%s2 + $0x10] sm:$0xff]
        %v340 = vld [vmem:[%s2 + $0x18] sm:$0xff]
        %v341 = vld [vmem:[%s3] sm:$0x1]
        %v343 = vlaneseq
        %v344 = vshrl.u32 %v343, 7
        %v345 = vsub.s32 0, %v344
        %v346 = vrot.slane %v341, %v345
        %vm348 = vcmask 261120
        %v350 = vsel %vm348, %v336, 0
        %352 = vmatprep.subr.mxu0 0.0
        %353 = vmatpush1.msra.mxu0 %v337
        %354 = vmatprep.subr.mxu0 0.0
        %355 = vmatpush1.msra.mxu0 %v338
        %356 = vmatprep.subr.mxu0 0.0
        %357 = vmatpush1.msra.mxu0 %v339
        %358 = vmatprep.subr.mxu0 0.0
        %359 = vmatpush1.msra.mxu0 %v340
        %360 = vmatprep.subr.mxu0 0.0
        %361 = vmatpush1.msra.mxu0 0.0
        %362 = vmatprep.subr.mxu0 0.0
        %363 = vmatpush1.msra.mxu0 0.0
        %364 = vmatprep.subr.mxu0 0.0
        %365 = vmatpush1.msra.mxu0 0.0
        %366 = vmatprep.subr.mxu0 0.0
        %367 = vmatpush1.msra.mxu0 0.0
        %368 = vmatprep.subr.mxu0 0.0
        %369 = vmatpush1.msra.mxu0 0.0
        %370 = vmatprep.subr.mxu0 0.0
        %371 = vmatpush1.msra.mxu0 0.0
        %372 = vmatprep.subr.mxu0 0.0
        %373 = vmatpush1.msra.mxu0 0.0
        %374 = vmatprep.subr.mxu0 0.0
        %375 = vmatpush1.msra.mxu0 0.0
        %376 = vmatprep.subr.mxu0 0.0
        %377 = vmatpush1.msra.mxu0 0.0
        %378 = vmatprep.subr.mxu0 0.0
        %379 = vmatpush1.msra.mxu0 0.0
        %380 = vmatprep.subr.mxu0 0.0
        %381 = vmatpush1.msra.mxu0 0.0
        %382 = vmatprep.subr.mxu0 0.0
        %383 = vmatpush1.msra.mxu0 0.0
        %384 = vmatprep.subr.mxu0 0.0
        %385 = vmatpush1.msra.mxu0 0.0
        %386 = vmatprep.subr.mxu0 0.0
        %387 = vmatpush1.msra.mxu0 0.0
        %388 = vmatprep.subr.mxu0 0.0
        %389 = vmatpush1.msra.mxu0 0.0
        %390 = vmatprep.subr.mxu0 0.0
        %391 = vmatpush1.msra.mxu0 0.0
        %392 = vmatprep.subr.mxu0 0.0
        %393 = vmatpush1.msra.mxu0 0.0
        %394 = vmatprep.subr.mxu0 0.0
        %395 = vmatpush1.msra.mxu0 0.0
        %396 = vmatprep.subr.mxu0 0.0
        %397 = vmatpush1.msra.mxu0 0.0
        %398 = vmatprep.subr.mxu0 0.0
        %399 = vmatpush1.msra.mxu0 0.0
        %400 = vmatprep.subr.mxu0 0.0
        %401 = vmatpush1.msra.mxu0 0.0
        %402 = vmatprep.subr.mxu0 0.0
        %403 = vmatpush1.msra.mxu0 0.0
        %404 = vmatprep.subr.mxu0 0.0
        %405 = vmatpush1.msra.mxu0 0.0
        %406 = vmatprep.subr.mxu0 0.0
        %407 = vmatpush1.msra.mxu0 0.0
        %408 = vmatprep.subr.mxu0 0.0
        %409 = vmatpush1.msra.mxu0 0.0
        %410 = vmatprep.subr.mxu0 0.0
        %411 = vmatpush1.msra.mxu0 0.0
        %412 = vmatprep.subr.mxu0 0.0
        %413 = vmatpush1.msra.mxu0 0.0
        %414 = vmatprep.subr.mxu0 0.0
        %415 = vmatpush1.msra.mxu0 0.0
        %416 = vmatprep.mubr.f32.mxu0 0.0
        %417 = vmatmul.mubr.f32.gmra.mrb[0].mxu0 %v350
        %v418 = vpop.f32.mrb[0].mxu0
        %v419 = vadd.f32 %v346, %v418
        %v420 = vpop.f32.mrb[0].mxu0
        %421 = vdwg.mxu0
        %v422 = vxor.u32 %v419, 2147483648
        %v423 = vmul.f32 %v422, 1.442695
        %v424 = vpow.pop %v423
        %v425 = vadd.f32 %v424, 1.0
        %v426 = vrcp.pop %v425
        %v427 = vmul.f32 1.0, %v426
        %v428 = vmul.f32 %v419, %v427
        %v429 = vxor.u32 %v428, 2147483648
        %v430 = vmul.f32 %v429, 1.442695
        %v431 = vpow.pop %v430
        %v432 = vadd.f32 %v431, 1.0
        %v433 = vrcp.pop %v432
        %v434 = vmul.f32 1.0, %v433
        %v435 = vmul.f32 %v428, %v434
        %vm436 = vcmask 130048
        %437 = vst.msk [vmem:[%s320] sm:$0xff] %vm436, %v435
        %v438 = vld [vmem:[%s4] sm:$0xff]
        %v439 = vld [vmem:[%s4 + $0x8] sm:$0xff]
        %v440 = vld [vmem:[%s5] sm:$0x1]
        %v442 = vlaneseq
        %v443 = vshrl.u32 %v442, 7
        %v444 = vsub.s32 0, %v443
        %v445 = vrot.slane %v440, %v444
        %v448 = vsel %vm436, %v435, 0
        %450 = vmatprep.subr.mxu0 0.0
        %451 = vmatpush1.msra.mxu0 %v438
        %452 = vmatprep.subr.mxu0 0.0
        %453 = vmatpush1.msra.mxu0 %v439
        %454 = vmatprep.subr.mxu0 0.0
        %455 = vmatpush1.msra.mxu0 0.0
        %456 = vmatprep.subr.mxu0 0.0
        %457 = vmatpush1.msra.mxu0 0.0
        %458 = vmatprep.subr.mxu0 0.0
        %459 = vmatpush1.msra.mxu0 0.0
        %460 = vmatprep.subr.mxu0 0.0
        %461 = vmatpush1.msra.mxu0 0.0
        %462 = vmatprep.subr.mxu0 0.0
        %463 = vmatpush1.msra.mxu0 0.0
        %464 = vmatprep.subr.mxu0 0.0
        %465 = vmatpush1.msra.mxu0 0.0
        %466 = vmatprep.subr.mxu0 0.0
        %467 = vmatpush1.msra.mxu0 0.0
        %468 = vmatprep.subr.mxu0 0.0
        %469 = vmatpush1.msra.mxu0 0.0
        %470 = vmatprep.subr.mxu0 0.0
        %471 = vmatpush1.msra.mxu0 0.0
        %472 = vmatprep.subr.mxu0 0.0
        %473 = vmatpush1.msra.mxu0 0.0
        %474 = vmatprep.subr.mxu0 0.0
        %475 = vmatpush1.msra.mxu0 0.0
        %476 = vmatprep.subr.mxu0 0.0
        %477 = vmatpush1.msra.mxu0 0.0
        %478 = vmatprep.subr.mxu0 0.0
        %479 = vmatpush1.msra.mxu0 0.0
        %480 = vmatprep.subr.mxu0 0.0
        %481 = vmatpush1.msra.mxu0 0.0
        %482 = vmatprep.subr.mxu0 0.0
        %483 = vmatpush1.msra.mxu0 0.0
        %484 = vmatprep.subr.mxu0 0.0
        %485 = vmatpush1.msra.mxu0 0.0
        %486 = vmatprep.subr.mxu0 0.0
        %487 = vmatpush1.msra.mxu0 0.0
        %488 = vmatprep.subr.mxu0 0.0
        %489 = vmatpush1.msra.mxu0 0.0
        %490 = vmatprep.subr.mxu0 0.0
        %491 = vmatpush1.msra.mxu0 0.0
        %492 = vmatprep.subr.mxu0 0.0
        %493 = vmatpush1.msra.mxu0 0.0
        %494 = vmatprep.subr.mxu0 0.0
        %495 = vmatpush1.msra.mxu0 0.0
        %496 = vmatprep.subr.mxu0 0.0
        %497 = vmatpush1.msra.mxu0 0.0
        %498 = vmatprep.subr.mxu0 0.0
        %499 = vmatpush1.msra.mxu0 0.0
        %500 = vmatprep.subr.mxu0 0.0
        %501 = vmatpush1.msra.mxu0 0.0
        %502 = vmatprep.subr.mxu0 0.0
        %503 = vmatpush1.msra.mxu0 0.0
        %504 = vmatprep.subr.mxu0 0.0
        %505 = vmatpush1.msra.mxu0 0.0
        %506 = vmatprep.subr.mxu0 0.0
        %507 = vmatpush1.msra.mxu0 0.0
        %508 = vmatprep.subr.mxu0 0.0
        %509 = vmatpush1.msra.mxu0 0.0
        %510 = vmatprep.subr.mxu0 0.0
        %511 = vmatpush1.msra.mxu0 0.0
        %512 = vmatprep.subr.mxu0 0.0
        %513 = vmatpush1.msra.mxu0 0.0
        %514 = vmatprep.mubr.f32.mxu0 0.0
        %515 = vmatmul.mubr.f32.gmra.mrb[0].mxu0 %v448
        %v516 = vpop.f32.mrb[0].mxu0
        %v517 = vadd.f32 %v445, %v516
        %v518 = vpop.f32.mrb[0].mxu0
        %519 = vdwg.mxu0
        %520 = vst.msk [vmem:[%s327] sm:$0xff] %vm348, %v517
        %v521 = vld [vmem:[%s335] sm:$0xff]
        %v522 = vadd.f32 %v517, %v521
        %523 = vst.msk [vmem:[%s313] sm:$0xff] %vm348, %v522
        %s524 = sand.u32 %s170, 1
        %s525 = scalar_lea.sflag [#allocation3], %s524
        %s526 = sand.u32 %s170, 1
        %s527 = smul.addr %s526, 8
        %s528 = scalar_lea.vmem [#allocation2], %s527
        %s529 = sand.u32 %s26, 1
        %s530 = scalar_lea.sflag [#allocation5], %s529
        %s531 = sand.u32 %s196, 1
        %s532 = smul.addr %s531, 8
        %s533 = scalar_lea.vmem [#allocation4], %s532
        %s534 = sand.u32 %s26, 1
        %s535 = scalar_lea.sflag [#allocation5], %s534
        %s536 = sand.u32 %s222, 1
        %s537 = smul.addr %s536, 8
        %s538 = scalar_lea.vmem [#allocation6], %s537
        // Predicated region
        $region45: #{tpu_custom_call.1} parent=43 // pred_check
          %p539 = pneg %p180
        $region46: #{tpu_custom_call.1} parent=43 // pred_check_branch
          %541 = sbr.rel (%p539) target = $region48
        $region47: #{tpu_custom_call.1} parent=43 // pred_region
          %s543 = ssub.s32 128, 128
          %544 = vsyncadd %s525, %s543
          %s545 = smul.addr %s26, 128
          %s546 = scalar_lea.hbm %s6, %s545
          %s548 = sshll.u32 %s528, 4
          %s549 = int_to_ptr.vmem [resolvable:$true] %s548
          %551 = dma.vmem_to_hbm [thread:$0]  %s549, 128, %s546, %s525
        $region48: #{tpu_custom_call.1} parent=43 // pred_fallthru
          _
        // Predicated region
        $region49: #{tpu_custom_call.1} parent=43 // pred_check
          %p552 = pneg %p206
        $region50: #{tpu_custom_call.1} parent=43 // pred_check_branch
          %554 = sbr.rel (%p552) target = $region52
        $region51: #{tpu_custom_call.1} parent=43 // pred_region
          %s556 = ssub.s32 128, 128
          %557 = vsyncadd %s530, %s556
          %s558 = smul.addr %s26, 128
          %s559 = scalar_lea.hbm %s7, %s558
          %s561 = sshll.u32 %s533, 4
          %s562 = int_to_ptr.vmem [resolvable:$true] %s561
          %564 = dma.vmem_to_hbm [thread:$0]  %s562, 128, %s559, %s530
        $region52: #{tpu_custom_call.1} parent=43 // pred_fallthru
          _
        // Predicated region
        $region53: #{tpu_custom_call.1} parent=43 // pred_check
          %p565 = pneg %p232
        $region54: #{tpu_custom_call.1} parent=43 // pred_check_branch
          %567 = sbr.rel (%p565) target = $region56
        $region55: #{tpu_custom_call.1} parent=43 // pred_region
          %s569 = ssub.s32 128, 128
          %570 = vsyncadd %s535, %s569
          %s571 = smul.addr %s26, 128
          %s572 = scalar_lea.hbm %s8, %s571
          %s574 = sshll.u32 %s538, 4
          %s575 = int_to_ptr.vmem [resolvable:$true] %s574
          %577 = dma.vmem_to_hbm [thread:$0]  %s575, 128, %s572, %s535
        $region56: #{tpu_custom_call.1} parent=43 // pred_fallthru
          _
      $region44: #{tpu_custom_call.1} parent=5 // pred_fallthru
        _
      %p578 = scmp.le.s32.totalorder 2, %s21
      // Predicated region
      $region57: #{tpu_custom_call.1} parent=5 // pred_check
        %p579 = pneg %p578
      $region58: #{tpu_custom_call.1} parent=5 // pred_check_branch
        %581 = sbr.rel (%p579) target = $region60
      $region59: #{tpu_custom_call.1} parent=5 // pred_region
        %s582 = ssub.s32 %s21, 2
        // Predicated region
        $region61: #{tpu_custom_call.1} parent=59 // pred_check
          %p583 = pneg %p186
        $region62: #{tpu_custom_call.1} parent=59 // pred_check_branch
          %585 = sbr.rel (%p583) target = $region64
        $region63: #{tpu_custom_call.1} parent=59 // pred_region
          %s586 = sand.u32 %s171, 1
          %s587 = scalar_lea.sflag [#allocation3], %s586
          %s588 = sand.u32 %s171, 1
          %s589 = smul.addr %s588, 8
          %s590 = scalar_lea.vmem [#allocation2], %s589
          %591 = dma.done %s587, 128
        $region64: #{tpu_custom_call.1} parent=59 // pred_fallthru
          _
        // Predicated region
        $region65: #{tpu_custom_call.1} parent=59 // pred_check
          %p592 = pneg %p212
        $region66: #{tpu_custom_call.1} parent=59 // pred_check_branch
          %594 = sbr.rel (%p592) target = $region68
        $region67: #{tpu_custom_call.1} parent=59 // pred_region
          %s595 = sand.u32 %s27, 1
          %s596 = scalar_lea.sflag [#allocation5], %s595
          %s597 = sand.u32 %s197, 1
          %s598 = smul.addr %s597, 8
          %s599 = scalar_lea.vmem [#allocation4], %s598
          %600 = dma.done %s596, 128
        $region68: #{tpu_custom_call.1} parent=59 // pred_fallthru
          _
        // Predicated region
        $region69: #{tpu_custom_call.1} parent=59 // pred_check
          %p601 = pneg %p238
        $region70: #{tpu_custom_call.1} parent=59 // pred_check_branch
          %603 = sbr.rel (%p601) target = $region72
        $region71: #{tpu_custom_call.1} parent=59 // pred_region
          %s604 = sand.u32 %s27, 1
          %s605 = scalar_lea.sflag [#allocation5], %s604
          %s606 = sand.u32 %s223, 1
          %s607 = smul.addr %s606, 8
          %s608 = scalar_lea.vmem [#allocation6], %s607
          %609 = dma.done %s605, 128
        $region72: #{tpu_custom_call.1} parent=59 // pred_fallthru
          _
      $region60: #{tpu_custom_call.1} parent=5 // pred_fallthru
        _
    $region6: #{tpu_custom_call.1} parent=1 // loop_footer
      %s25 = sadd.s32 1, %s21
    $region7: #{tpu_custom_call.1} parent=1 // loop_footer_branch
      %20 = sbr.rel target = $region3
    $region8: #{tpu_custom_call.1} parent=1 // loop_exit
      _
    %610 = vsyncpa [#allocation3], 1
    %s611 = scalar_lea.sflag [#allocation3], 1
    %612 = vsyncpa %s611, 1
    %613 = vsyncpa [#allocation5], 1
    %s614 = scalar_lea.sflag [#allocation5], 1
    %615 = vsyncpa %s614, 1

</llo_original>
